<compile_context>
chip_gen: v5e
topology: v5e:2x2
jax: 0.10.0
libtpu: 0.0.40
codegen_flags: <defaults>
</compile_context>

<pallas_src>
import functools

import jax
import jax.numpy as jnp
from jax.experimental import pallas as pl
from jax.experimental.pallas import tpu as pltpu

_MIB = 1024 * 1024


def _round_up(v, m):
    return (v + m - 1) // m * m


def _chip_vmem_and_cores():
    """Best-effort (vmem_capacity_bytes, tensorcores_per_device)."""
    vmem = None
    try:
        info = pltpu.get_tpu_info()
        for attr in ("vmem_capacity_bytes", "vmem_bytes", "vmem_size_bytes"):
            v = getattr(info, attr, None)
            if v:
                vmem = int(v)
                break
    except Exception:
        vmem = None
    kind = ""
    try:
        kind = jax.devices()[0].device_kind.lower()
    except Exception:
        pass
    cores = 2 if (("v7" in kind) or ("v4" in kind) or ("v5p" in kind)) else 1
    if vmem is None:
        if "v7" in kind:
            vmem = 64 * _MIB          # v7x: 64 MiB per TensorCore
        elif kind:
            vmem = 128 * _MIB         # v4/v5e/v5p/v6e: 128 MiB
        else:
            vmem = 64 * _MIB          # unknown: be conservative
    return vmem, cores


def _auto_sizes(vmem_cap):
    # (target_block_bytes, vmem_limit_bytes); footprint/step ~ 6x block bytes.
    if vmem_cap >= 100 * _MIB:        # 128 MiB VMEM parts
        return 12 * _MIB, 96 * _MIB
    return 4 * _MIB, 52 * _MIB        # v7x (64 MiB/TC) and unknown


# ---------------------------------------------------------------------------
# Single-sweep kernel: one block holds the full spatial extent of its rows.
# ---------------------------------------------------------------------------
def _simam_kernel(x_ref, o_ref, *, spatial, count, n, e_lambda):
    x = x_ref[...].astype(jnp.float32)
    if spatial % 128 != 0:
        # Non-128-aligned lane extent: explicitly zero the padded tail lanes
        # before reducing (one VALU select, hidden under HBM traffic).
        lane = jax.lax.broadcasted_iota(jnp.int32, x.shape, 1)
        valid = lane < spatial
        mask = lambda v: jnp.where(valid, v, 0.0)
    else:
        mask = lambda v: v

    # Two-pass variance (matches the reference's sum((x-mu)^2) numerics).
    sum_x = jnp.sum(mask(x), axis=-1, keepdims=True)          # (rows, 1)
    mu = sum_x * (1.0 / count)
    diff = x - mu
    dm = mask(diff)
    s_sum = jnp.sum(dm * dm, axis=-1, keepdims=True)          # (rows, 1)

    # Per-row reciprocal -> one VALU multiply per element instead of a divide.
    inv_denom = pl.reciprocal(4.0 * (s_sum * (1.0 / n) + e_lambda), approx=False)
    y = diff * diff * inv_denom + 0.5
    # y >= 0.5, so exp(-y) is always in (0, 1): this sigmoid form is stable.
    sig = pl.reciprocal(1.0 + jnp.exp(-y), approx=False)
    o_ref[...] = (x * sig).astype(o_ref.dtype)


# ---------------------------------------------------------------------------
# Large-spatial fallback: pass 1 accumulates per-row sum / sum^2 over spatial
# chunks; pass 2 applies the elementwise SimAM transform.
# TODO(synk): pass 1 uses the one-pass sum/sum^2 identity (cancellation risk
# for huge-mean / tiny-variance inputs); a third pass would restore the exact
# two-pass numerics at the cost of one more HBM read of x.
# ---------------------------------------------------------------------------
def _stats_kernel(x_ref, sum_ref, sq_ref, *, spatial, tile_sp):
    s = pl.program_id(1)

    @pl.when(s == 0)
    def _():
        sum_ref[...] = jnp.zeros_like(sum_ref)
        sq_ref[...] = jnp.zeros_like(sq_ref)

    x = x_ref[...].astype(jnp.float32)
    if (spatial % tile_sp != 0) or (tile_sp % 128 != 0):
        lane = jax.lax.broadcasted_iota(jnp.int32, x.shape, 1) + s * tile_sp
        x = jnp.where(lane < spatial, x, 0.0)
    sum_ref[...] += jnp.sum(x, axis=-1, keepdims=True)
    sq_ref[...] += jnp.sum(x * x, axis=-1, keepdims=True)


def _apply_kernel(sum_ref, sq_ref, x_ref, o_ref, *, count, n, e_lambda):
    x = x_ref[...].astype(jnp.float32)
    mu = sum_ref[...] * (1.0 / count)
    s_sum = jnp.maximum(sq_ref[...] - count * mu * mu, 0.0)
    inv_denom = pl.reciprocal(4.0 * (s_sum * (1.0 / n) + e_lambda), approx=False)
    diff = x - mu
    y = diff * diff * inv_denom + 0.5
    sig = pl.reciprocal(1.0 + jnp.exp(-y), approx=False)
    o_ref[...] = (x * sig).astype(o_ref.dtype)


# ---------------------------------------------------------------------------
# Wrapper
# ---------------------------------------------------------------------------
def simam_forward(x, e_lambda=1e-4, *, target_block_bytes=None,
                  vmem_limit_bytes=None, force_two_pass=False):
    """SimAM forward. x: (b, c, d, h, w). Returns same shape/dtype."""
    b, c, d, h, w = x.shape
    spatial = d * h * w
    n = spatial - 1
    rows = b * c

    dtype = x.dtype
    dtype_bytes = jnp.dtype(dtype).itemsize
    # f32 -> 8 sublanes / vreg, bf16 -> 16 (packed), int8/fp8 -> 32.
    sublane = 8 * max(1, 4 // dtype_bytes)
    spatial_phys = _round_up(spatial, 128)      # physical lane footprint

    vmem_cap, num_tc = _chip_vmem_and_cores()
    auto_blk, auto_lim = _auto_sizes(vmem_cap)
    if target_block_bytes is None:
        target_block_bytes = auto_blk
    if vmem_limit_bytes is None:
        vmem_limit_bytes = auto_lim

    x2d = x.reshape(rows, spatial)              # free (contiguous) reshape

    # Per-row VMEM footprint of the single-sweep path:
    #   2 input + 2 output pipeline buffers (input dtype) + ~2 f32 temps.
    per_row_foot = 4 * spatial_phys * dtype_bytes + 2 * spatial_phys * 4
    budget = int(0.85 * vmem_limit_bytes)
    rows_by_vmem = (budget // per_row_foot) // sublane * sublane

    kernel_common = dict(count=float(spatial), n=float(n),
                         e_lambda=float(e_lambda))

    if not force_two_pass and rows_by_vmem >= sublane:
        # ---- single-sweep path -------------------------------------------
        rows_by_target = max(
            sublane,
            (target_block_bytes // (spatial_phys * dtype_bytes)) // sublane * sublane)
        tile_rows = min(rows_by_target, rows_by_vmem, _round_up(rows, sublane))
        if tile_rows >= rows and num_tc > 1 and rows >= 2 * sublane:
            # Force >= 2 grid steps so the row axis shards across both TCs.
            tile_rows = _round_up(pl.cdiv(rows, 2), sublane)
        if tile_rows >= rows:
            tile_rows = rows                    # single full-extent block
        grid = (pl.cdiv(rows, tile_rows),)

        kernel = functools.partial(_simam_kernel, spatial=spatial, **kernel_common)
        out2d = pl.pallas_call(
            kernel,
            out_shape=jax.ShapeDtypeStruct((rows, spatial), dtype),
            grid_spec=pltpu.PrefetchScalarGridSpec(
                num_scalar_prefetch=0,
                grid=grid,
                in_specs=[pl.BlockSpec((tile_rows, spatial), lambda i: (i, 0))],
                out_specs=pl.BlockSpec((tile_rows, spatial), lambda i: (i, 0))),
            compiler_params=pltpu.CompilerParams(
                dimension_semantics=("parallel",),
                vmem_limit_bytes=int(vmem_limit_bytes)),
            cost_estimate=pl.CostEstimate(
                flops=int(12 * rows * spatial),
                transcendentals=int(rows * spatial),
                bytes_accessed=int(2 * rows * spatial * dtype_bytes)),
        )(x2d)
        return out2d.reshape(b, c, d, h, w)

    # ---- large-spatial fallback: chunked spatial, two pallas_calls --------
    tile_rows = rows if rows <= sublane else sublane
    want_sp = max(128, target_block_bytes // max(1, tile_rows * dtype_bytes))
    if want_sp >= spatial:
        tile_sp = spatial                        # full-dim single chunk
    else:
        tile_sp = max(128, (want_sp // 128) * 128)
    grid = (pl.cdiv(rows, tile_rows), pl.cdiv(spatial, tile_sp))

    sum_x, sum_x2 = pl.pallas_call(
        functools.partial(_stats_kernel, spatial=spatial, tile_sp=tile_sp),
        out_shape=(jax.ShapeDtypeStruct((rows, 1), jnp.float32),
                   jax.ShapeDtypeStruct((rows, 1), jnp.float32)),
        grid_spec=pltpu.PrefetchScalarGridSpec(
            num_scalar_prefetch=0,
            grid=grid,
            in_specs=[pl.BlockSpec((tile_rows, tile_sp), lambda i, s: (i, s))],
            out_specs=[pl.BlockSpec((tile_rows, 1), lambda i, s: (i, 0)),
                       pl.BlockSpec((tile_rows, 1), lambda i, s: (i, 0))]),
        compiler_params=pltpu.CompilerParams(
            dimension_semantics=("parallel", "arbitrary"),
            vmem_limit_bytes=int(vmem_limit_bytes)),
        cost_estimate=pl.CostEstimate(
            flops=int(3 * rows * spatial),
            transcendentals=0,
            bytes_accessed=int(rows * spatial * dtype_bytes)),
    )(x2d)

    out2d = pl.pallas_call(
        functools.partial(_apply_kernel, **kernel_common),
        out_shape=jax.ShapeDtypeStruct((rows, spatial), dtype),
        grid_spec=pltpu.PrefetchScalarGridSpec(
            num_scalar_prefetch=0,
            grid=grid,
            in_specs=[pl.BlockSpec((tile_rows, 1), lambda i, s: (i, 0)),
                      pl.BlockSpec((tile_rows, 1), lambda i, s: (i, 0)),
                      pl.BlockSpec((tile_rows, tile_sp), lambda i, s: (i, s))],
            out_specs=pl.BlockSpec((tile_rows, tile_sp), lambda i, s: (i, s))),
        compiler_params=pltpu.CompilerParams(
            dimension_semantics=("parallel", "arbitrary"),
            vmem_limit_bytes=int(vmem_limit_bytes)),
        cost_estimate=pl.CostEstimate(
            flops=int(10 * rows * spatial),
            transcendentals=int(rows * spatial),
            bytes_accessed=int(2 * rows * spatial * dtype_bytes)),
    )(sum_x, sum_x2, x2d)
    return out2d.reshape(b, c, d, h, w)


def _simam_ref(x, e_lambda=1e-4):
    # Pure-JAX reference mirroring the PyTorch forward exactly.
    b, c, d, h, w = x.shape
    n = d * h * w - 1
    mu = jnp.mean(x, axis=(2, 3, 4), keepdims=True)
    x_mu_sq = (x - mu) ** 2
    y = x_mu_sq / (4.0 * (jnp.sum(x_mu_sq, axis=(2, 3, 4), keepdims=True) / n
                          + e_lambda)) + 0.5
    return x * jax.nn.sigmoid(y)


if __name__ == "__main__":
    # Case 1: lane-aligned spatial (4*8*8 = 256), rows = b*c = 8.
    x1 = jax.random.normal(jax.random.PRNGKey(0), (2, 4, 4, 8, 8), dtype=jnp.float32)
    o1 = jax.block_until_ready(simam_forward(x1))
    r1 = _simam_ref(x1)
    assert o1.shape == x1.shape and o1.dtype == x1.dtype
    assert jnp.allclose(o1, r1, atol=2e-5, rtol=2e-5), "mismatch (aligned case)"

    # Case 2: ragged shapes, no wrapper padding (spatial=105, rows=6).
    x2 = jax.random.normal(jax.random.PRNGKey(0), (2, 3, 3, 5, 7), dtype=jnp.float32)
    o2 = jax.block_until_ready(simam_forward(x2))
    r2 = _simam_ref(x2)
    assert o2.shape == x2.shape and o2.dtype == x2.dtype
    assert jnp.allclose(o2, r2, atol=2e-5, rtol=2e-5), "mismatch (ragged case)"

    # Case 3: forced large-spatial fallback (chunked spatial, partial chunks).
    x3 = jax.random.normal(jax.random.PRNGKey(0), (1, 2, 4, 10, 13), dtype=jnp.float32)
    o3 = jax.block_until_ready(
        simam_forward(x3, force_two_pass=True, target_block_bytes=2048))
    r3 = _simam_ref(x3)
    assert o3.shape == x3.shape and o3.dtype == x3.dtype
    assert jnp.allclose(o3, r3, atol=2e-5, rtol=2e-5), "mismatch (fallback case)"

    print("KERNEL_OK")
</pallas_src>

<mosaic_0001>
module attributes {stable_mosaic.version = 11 : i64} {
  func.func @_simam_kernel(%arg0: i32, %arg1: memref<8x256xf32, #tpu.memory_space<vmem>>, %arg2: memref<8x256xf32, #tpu.memory_space<vmem>>) attributes {dimension_semantics = [#tpu.dimension_semantics<parallel>], iteration_bounds = array<i64: 1>, scalar_prefetch = 0 : i64, scratch_operands = 0 : i64, tpu.core_type = #tpu.core_type<tc>, window_params = [{transform_indices = @transform_0, window_bounds = array<i64: 8, 256>}, {transform_indices = @transform_1, window_bounds = array<i64: 8, 256>}]} {
    %c0 = arith.constant 0 : index
    %c0_0 = arith.constant 0 : index
    %0 = vector.load %arg1[%c0, %c0_0] : memref<8x256xf32, #tpu.memory_space<vmem>>, vector<8x256xf32>
    %cst = arith.constant dense<0.000000e+00> : vector<8xf32>
    %1 = vector.multi_reduction <add>, %0, %cst [1] : vector<8x256xf32> to vector<8xf32>
    %2 = vector.shape_cast %1 : vector<8xf32> to vector<8x1xf32>
    %cst_1 = arith.constant 3.906250e-03 : f32
    %3 = vector.broadcast %cst_1 : f32 to vector<8x1xf32>
    %4 = arith.mulf %2, %3 : vector<8x1xf32>
    %5 = vector.broadcast %4 : vector<8x1xf32> to vector<8x256xf32>
    %6 = arith.subf %0, %5 : vector<8x256xf32>
    %7 = arith.mulf %6, %6 : vector<8x256xf32>
    %cst_2 = arith.constant dense<0.000000e+00> : vector<8xf32>
    %8 = vector.multi_reduction <add>, %7, %cst_2 [1] : vector<8x256xf32> to vector<8xf32>
    %9 = vector.shape_cast %8 : vector<8xf32> to vector<8x1xf32>
    %cst_3 = arith.constant 0.00392156886 : f32
    %10 = vector.broadcast %cst_3 : f32 to vector<8x1xf32>
    %11 = arith.mulf %9, %10 : vector<8x1xf32>
    %cst_4 = arith.constant 9.99999974E-5 : f32
    %12 = vector.broadcast %cst_4 : f32 to vector<8x1xf32>
    %13 = arith.addf %11, %12 : vector<8x1xf32>
    %cst_5 = arith.constant 4.000000e+00 : f32
    %14 = vector.broadcast %cst_5 : f32 to vector<8x1xf32>
    %15 = arith.mulf %14, %13 : vector<8x1xf32>
    %16 = tpu.reciprocal %15 : vector<8x1xf32> -> vector<8x1xf32>
    %17 = arith.mulf %6, %6 : vector<8x256xf32>
    %18 = vector.broadcast %16 : vector<8x1xf32> to vector<8x256xf32>
    %19 = arith.mulf %17, %18 : vector<8x256xf32>
    %cst_6 = arith.constant 5.000000e-01 : f32
    %20 = vector.broadcast %cst_6 : f32 to vector<8x256xf32>
    %21 = arith.addf %19, %20 : vector<8x256xf32>
    %cst_7 = arith.constant 0.000000e+00 : f32
    %22 = vector.broadcast %cst_7 : f32 to vector<8x256xf32>
    %23 = arith.subf %22, %21 : vector<8x256xf32>
    %24 = math.exp %23 : vector<8x256xf32>
    %cst_8 = arith.constant 1.000000e+00 : f32
    %25 = vector.broadcast %cst_8 : f32 to vector<8x256xf32>
    %26 = arith.addf %25, %24 : vector<8x256xf32>
    %27 = tpu.reciprocal %26 : vector<8x256xf32> -> vector<8x256xf32>
    %28 = arith.mulf %0, %27 : vector<8x256xf32>
    %c0_9 = arith.constant 0 : index
    %c0_10 = arith.constant 0 : index
    %29 = vector.load %arg2[%c0_9, %c0_10] : memref<8x256xf32, #tpu.memory_space<vmem>>, vector<8x256xf32>
    tpu.vector_store %arg2[%c0_9, %c0_10], %28 {strides = array<i32>} : memref<8x256xf32, #tpu.memory_space<vmem>>, vector<8x256xf32>,
    return
  }
  func.func @transform_0(%arg0: i32) -> (i32, i32) {
    %c0_i32 = arith.constant 0 : i32
    %c0_i32_0 = arith.constant 0 : i32
    return %arg0, %c0_i32 : i32, i32
  }
  func.func @transform_1(%arg0: i32) -> (i32, i32) {
    %c0_i32 = arith.constant 0 : i32
    %c0_i32_0 = arith.constant 0 : i32
    return %arg0, %c0_i32 : i32, i32
  }
}

</mosaic_0001>

<llo_original>
// kernel: tpu_custom_call.1
$region0: #{tpu_custom_call.1}
  #allocation0 [shape = 'u32[]', space=smem, size = 0x4, offset = 0x4, fixed_abs, tag = 'smem constant byte address 0x4 - core index']
  #allocation1 [shape = 'u32[72,128]{1,0:T(1,128)}', space=vmem, size = 0x9000, scoped, tag = 'internal scratch']
  %s0 = inlined_call_operand.hbm [shape: f32[8,256], index: 0, kind: input, shape index: {}]
  %s1 = inlined_call_operand.hbm [shape: f32[8,256], index: 1, kind: output, shape index: {}]
  %s2 = sld [smem:[#allocation0]]
  $region18: #{tpu_custom_call.1} parent=0
    _
  %s4 = ssub.s32 1, %s2
  %s5 = scalar_select 0, %s4, %s2
  $region1: #{tpu_custom_call.1} parent=0
    #allocation2 [shape = 'u8[8192]{0}', space=vmem, size = 0x2000, scoped, tag = 'input window, operand 0, single buffered']
    #allocation3 [shape = 's32[1]{0}', space=sflag, size = 0x4, scoped, tag = 'scoped memory for tpu_custom_call.1']
    #allocation4 [shape = 's32[1]{0}', space=sflag, size = 0x4, scoped, tag = 'scoped memory for tpu_custom_call.1']
    #allocation5 [shape = 'u8[8192]{0}', space=vmem, size = 0x2000, scoped, tag = 'output window, operand 0, single buffered']
    %6 = vsyncpa [#allocation3], 0
    %7 = vsyncpa [#allocation4], 0
    // Predicated region
    $region2: #{tpu_custom_call.1} parent=1 // pred_check
      _
    $region3: #{tpu_custom_call.1} parent=1 // pred_check_branch
      %9 = sbr.rel (0) target = $region5
    $region4: #{tpu_custom_call.1} parent=1 // pred_region
      %11 = vsyncadd [#allocation3], 0
      %s13 = sshll.u32 %s0, 4
      %s14 = int_to_ptr.hbm [resolvable:$true] %s13
      %s15 = sshll.u32 [#allocation2], 4
      %s16 = int_to_ptr.vmem [resolvable:$true] %s15
      %18 = dma.hbm_to_vmem [thread:$0]  %s14, 256, %s16, [#allocation3]
    $region5: #{tpu_custom_call.1} parent=1 // pred_fallthru
      _
    // Predicated region
    $region6: #{tpu_custom_call.1} parent=1 // pred_check
      _
    $region7: #{tpu_custom_call.1} parent=1 // pred_check_branch
      %20 = sbr.rel (0) target = $region9
    $region8: #{tpu_custom_call.1} parent=1 // pred_region
      %22 = dma.done [#allocation3], 256
    $region9: #{tpu_custom_call.1} parent=1 // pred_fallthru
      _
    %v23 = vld [vmem:[#allocation2] sm:$0xff]
    %v24 = vld [vmem:[#allocation2 + $0x8] sm:$0xff]
    %v25 = vadd.f32 %v23, %v24
    %26 = vadd.xlane.f32.xlu0 %v25
    %v27 = vpop.xlane.xlu0 %26
    %v28 = vmul.f32 %v27, 0.00390625
    %v29 = vsub.f32 %v23, %v28
    %v30 = vsub.f32 %v24, %v28
    %v31 = vmul.f32 %v29, %v29
    %v32 = vmul.f32 %v30, %v30
    %v33 = vadd.f32 %v31, %v32
    %34 = vadd.xlane.f32.xlu0 %v33
    %v35 = vpop.xlane.xlu0 %34
    %v36 = vmul.f32 %v35, 0.003921569
    %v37 = vadd.f32 %v36, 0.0001
    %v38 = vmul.f32 %v37, 4.0
    %v39 = vrcp.pop %v38
    %v40 = vmul.f32 %v38, %v39
    %v41 = vsub.f32 1.0, %v40
    %v42 = vmul.f32 %v39, %v41
    %v43 = vadd.f32 %v39, %v42
    %vm44 = vweird.f32 %v38
    %vm45 = vweird.f32 %v39
    %vm46 = vmor %vm44, %vm45
    %v47 = vsel %vm46, %v39, %v43
    %v48 = vand.u32 2147483647, %v38
    %vm49 = vcmp.eq.f32.partialorder %v48, 8.507059e+37
    %v50 = vand.u32 %v38, 2147483648
    %v51 = vor.u32 1.1754944e-38, %v50
    %v52 = vsel %vm49, %v51, %v47
    %v53 = vmul.f32 %v31, %v52
    %v54 = vmul.f32 %v32, %v52
    %v55 = vadd.f32 %v53, 0.5
    %v56 = vadd.f32 %v54, 0.5
    %v57 = vsub.f32 0.0, %v55
    %v58 = vsub.f32 0.0, %v56
    %v59 = vmul.f32 %v57, 1.442695
    %v60 = vpow.pop %v59
    %v61 = vmul.f32 %v58, 1.442695
    %v62 = vpow.pop %v61
    %v63 = vadd.f32 %v60, 1.0
    %v64 = vadd.f32 %v62, 1.0
    %v65 = vrcp.pop %v63
    %v66 = vmul.f32 %v63, %v65
    %v67 = vsub.f32 1.0, %v66
    %v68 = vmul.f32 %v65, %v67
    %v69 = vadd.f32 %v65, %v68
    %vm70 = vweird.f32 %v63
    %vm71 = vweird.f32 %v65
    %vm72 = vmor %vm70, %vm71
    %v73 = vsel %vm72, %v65, %v69
    %v74 = vand.u32 2147483647, %v63
    %vm75 = vcmp.eq.f32.partialorder %v74, 8.507059e+37
    %v76 = vand.u32 %v63, 2147483648
    %v77 = vor.u32 1.1754944e-38, %v76
    %v78 = vsel %vm75, %v77, %v73
    %v79 = vrcp.pop %v64
    %v80 = vmul.f32 %v64, %v79
    %v81 = vsub.f32 1.0, %v80
    %v82 = vmul.f32 %v79, %v81
    %v83 = vadd.f32 %v79, %v82
    %vm84 = vweird.f32 %v64
    %vm85 = vweird.f32 %v79
    %vm86 = vmor %vm84, %vm85
    %v87 = vsel %vm86, %v79, %v83
    %v88 = vand.u32 2147483647, %v64
    %vm89 = vcmp.eq.f32.partialorder %v88, 8.507059e+37
    %v90 = vand.u32 %v64, 2147483648
    %v91 = vor.u32 1.1754944e-38, %v90
    %v92 = vsel %vm89, %v91, %v87
    %v93 = vmul.f32 %v23, %v78
    %v94 = vmul.f32 %v24, %v92
    %95 = vst [vmem:[#allocation5] sm:$0xff] %v93
    %96 = vst [vmem:[#allocation5 + $0x8] sm:$0xff] %v94
    // Predicated region
    $region10: #{tpu_custom_call.1} parent=1 // pred_check
      _
    $region11: #{tpu_custom_call.1} parent=1 // pred_check_branch
      %98 = sbr.rel (0) target = $region13
    $region12: #{tpu_custom_call.1} parent=1 // pred_region
      %100 = vsyncadd [#allocation4], 0
      %s102 = sshll.u32 [#allocation5], 4
      %s103 = int_to_ptr.vmem [resolvable:$true] %s102
      %s104 = sshll.u32 %s1, 4
      %s105 = int_to_ptr.hbm [resolvable:$true] %s104
      %107 = dma.vmem_to_hbm [thread:$0]  %s103, 256, %s105, [#allocation4]
    $region13: #{tpu_custom_call.1} parent=1 // pred_fallthru
      _
    // Predicated region
    $region14: #{tpu_custom_call.1} parent=1 // pred_check
      _
    $region15: #{tpu_custom_call.1} parent=1 // pred_check_branch
      %109 = sbr.rel (0) target = $region17
    $region16: #{tpu_custom_call.1} parent=1 // pred_region
      %111 = dma.done [#allocation4], 256
    $region17: #{tpu_custom_call.1} parent=1 // pred_fallthru
      _
    %112 = vsyncpa [#allocation3], 1
    %113 = vsyncpa [#allocation4], 1

</llo_original>
